<compile_context>
chip_gen: v5e
topology: v5e:2x2
jax: 0.10.0
libtpu: 0.0.40
codegen_flags: <defaults>
</compile_context>

<pallas_src>
import math
import functools

import jax
import jax.numpy as jnp
from jax import lax
from jax.experimental import pallas as pl
from jax.experimental.pallas import tpu as pltpu


# ----------------------------------------------------------------------------
# Parameters (deterministic in-script init; torch Linear(in,out) stored as
# (in, out) matrices, i.e. already transposed for x @ W + b).
# ----------------------------------------------------------------------------
def init_params(key, *, input_dim, embed_time, num_heads, nhidden, latent_dim, num_ref):
    E = embed_time
    ks = jax.random.split(key, 10)
    return dict(
        input_dim=input_dim,
        embed_time=E,
        num_heads=num_heads,
        # fixed reference time points (self.query in the PyTorch module)
        query=jnp.linspace(0.0, 1.0, num_ref, dtype=jnp.float32),
        # learn_time_embedding: nn.Linear(1, 1) and nn.Linear(1, E-1)
        w_lin=0.5 * jax.random.normal(ks[0], (1,), jnp.float32),
        b_lin=0.1 * jax.random.normal(ks[1], (1,), jnp.float32),
        w_per=jax.random.normal(ks[2], (E - 1,), jnp.float32),
        b_per=0.1 * jax.random.normal(ks[3], (E - 1,), jnp.float32),
        # multiTimeAttention: linears[0] (query proj), linears[1] (key proj)
        wq=(1.0 / math.sqrt(E)) * jax.random.normal(ks[4], (E, E), jnp.float32),
        bq=jnp.zeros((1, E), jnp.float32),
        wk=(1.0 / math.sqrt(E)) * jax.random.normal(ks[5], (E, E), jnp.float32),
        bk=jnp.zeros((1, E), jnp.float32),
        # multiTimeAttention: linears[-1] = Linear(num_heads*input_dim, nhidden)
        wo=(1.0 / math.sqrt(num_heads * input_dim))
        * jax.random.normal(ks[6], (num_heads * input_dim, nhidden), jnp.float32),
        bo=0.1 * jax.random.normal(ks[7], (1, nhidden), jnp.float32),
        # TODO(synk): self.encoder is dependency-injected in the PyTorch module;
        # modeled here as a deterministic Linear(nhidden, latent_dim).
        we=(1.0 / math.sqrt(nhidden))
        * jax.random.normal(ks[8], (nhidden, latent_dim), jnp.float32),
        be=0.1 * jax.random.normal(ks[9], (1, latent_dim), jnp.float32),
    )


def learn_time_embedding(tt, p):
    """tt: (..., T) -> (..., T, embed_time).  out = cat([Linear(1,1)(t), sin(Linear(1,E-1)(t))])."""
    tt = tt[..., None]
    out1 = tt * p["w_lin"][0] + p["b_lin"][0]
    out2 = jnp.sin(tt * p["w_per"] + p["b_per"])
    return jnp.concatenate([out1, out2], axis=-1)


# ----------------------------------------------------------------------------
# Feature probe: does jnp.sin lower inside a Pallas TPU kernel on this backend?
# ----------------------------------------------------------------------------
_SIN_SUPPORTED = None


def _in_kernel_sin_supported():
    global _SIN_SUPPORTED
    if _SIN_SUPPORTED is None:
        def _probe(x_ref, o_ref):
            o_ref[...] = jnp.sin(x_ref[...])
        try:
            x = jnp.zeros((8, 128), jnp.float32)
            jax.block_until_ready(
                pl.pallas_call(
                    _probe, out_shape=jax.ShapeDtypeStruct((8, 128), jnp.float32)
                )(x))
            _SIN_SUPPORTED = True
        except Exception:
            _SIN_SUPPORTED = False
    return _SIN_SUPPORTED


# ----------------------------------------------------------------------------
# Pallas kernel: one batch *tile* (block_b batch elements) per grid step.
#
# Refs (all 2-D, batch pre-flattened into rows by the wrapper):
#   qblk_ref : (h*L, E)        block-diagonal, pre-scaled query projection
#   [fused]  t_ref (Bb*T, 1), tp_ref (2, E)   raw times + embedding constants
#   [else]   key_ref (Bb*T, E)                precomputed key time embedding
#   slab_ref : (Bb*T, 2D)      [mask*values | mask]
#   wk/bk, wo/bo, we/be        weights / biases (we/be padded to Z_pad lanes)
#   o_ref    : (Bb*L, Z_pad)   encoder output slab (lane-dense)
#   acc_ref  : (Bb*L, h*D)     VMEM scratch accumulator (replaces concats)
# ----------------------------------------------------------------------------
def _mtan_enc_kernel(*refs, num_heads, block_b, fuse_time):
    if fuse_time:
        (qblk_ref, t_ref, tp_ref, slab_ref, wk_ref, bk_ref,
         wo_ref, bo_ref, we_ref, be_ref, o_ref) = refs[:-1]
    else:
        (qblk_ref, key_ref, slab_ref, wk_ref, bk_ref,
         wo_ref, bo_ref, we_ref, be_ref, o_ref) = refs[:-1]
    acc_ref = refs[-1]

    hL, E = qblk_ref.shape
    BT, D2 = slab_ref.shape
    D = D2 // 2
    L = hL // num_heads
    T = BT // block_b
    cdt = wk_ref.dtype                      # MXU compute dtype (bf16 fast path / f32)
    exact = (cdt == jnp.float32)

    # --- key time embedding: cat([w_lin*t + b_lin, sin(w_per*t + b_per)]) -----
    if fuse_time:
        t = t_ref[...]                      # (BT, 1) f32
        wfreq = tp_ref[0:1, :]              # (1, E)
        bphase = tp_ref[1:2, :]             # (1, E)
        phase = t * wfreq + bphase          # (BT, E) f32
        col = lax.broadcasted_iota(jnp.int32, (BT, E), 1)
        emb = jnp.where(col == 0, phase, jnp.sin(phase))
    else:
        emb = key_ref[...].astype(jnp.float32)

    # Key projection (mTAN linears[1]); batch folded into the matmul M dim.
    kp = jnp.dot(emb.astype(cdt), wk_ref[...],
                 preferred_element_type=jnp.float32) + bk_ref[...]
    kp = kp.astype(cdt)                     # (BT, E)

    # All heads' scores in ONE matmul: the query is block-diagonal over head
    # column-slices, so contracting the full E picks exactly head hd's slice
    # for rows hd*L:(hd+1)*L.  Contract last dims -> (h*L, BT), no transpose.
    dn = (((1,), (1,)), ((), ()))
    scores = lax.dot_general(qblk_ref[...], kp, dn,
                             preferred_element_type=jnp.float32)   # (h*L, BT) f32

    slab = slab_ref[...]                    # (BT, 2D) cdt: [mask*vals | mask]

    for b in range(block_b):
        seg = scores[:, b * T:(b + 1) * T]                        # (h*L, T)
        # Per-batch-segment row max: constant shift per row -> num/den ratio
        # unchanged; exp stays in (0, 1] so the bf16 cast cannot underflow a
        # whole segment relative to another batch element in the tile.
        es = jnp.exp(seg - jnp.max(seg, axis=-1, keepdims=True)).astype(cdt)
        nd = jnp.dot(es, slab[b * T:(b + 1) * T, :],
                     preferred_element_type=jnp.float32)          # (h*L, 2D)
        num = nd[:, :D]
        den = nd[:, D:]
        # Fully-masked (channel, query) rows: num == 0, keep output at 0.
        den_safe = jnp.where(den > 0.0, den, 1.0)
        if exact:
            out_b = num / den_safe
        else:
            out_b = num * pl.reciprocal(den_safe, approx=True)
        out_b = out_b.astype(acc_ref.dtype)                       # (h*L, D)
        # Scatter into the (Bb*L, h*D) scratch with static slice stores
        # (replaces the old concatenate chains).
        for hd in range(num_heads):
            acc_ref[b * L:(b + 1) * L, hd * D:(hd + 1) * D] = \
                out_b[hd * L:(hd + 1) * L, :]

    cat = acc_ref[...]                                            # (Bb*L, h*D)
    # mTAN output linear (linears[-1]) then the (synthetic) encoder linear,
    # batch folded into M; We/be are zero-padded to Z_pad lanes so the final
    # store is lane-dense (unmasked vst).
    attn = jnp.dot(cat, wo_ref[...], preferred_element_type=jnp.float32) + bo_ref[...]
    enc = jnp.dot(attn.astype(cdt), we_ref[...],
                  preferred_element_type=jnp.float32) + be_ref[...]
    o_ref[...] = enc.astype(o_ref.dtype)


def enc_mtan_pretrain_forward(x, time_steps, p, causal_mask=None, *,
                              block_b=None, mxu_dtype=jnp.bfloat16,
                              fuse_time_embedding=None):
    # TODO(synk): causal_mask branch of multiTimeAttention not implemented
    # (forward default is None); only the causal_mask=None path is supported.
    assert causal_mask is None
    D = p["input_dim"]
    h = p["num_heads"]
    E = p["embed_time"]
    assert E % h == 0
    ek = E // h

    if fuse_time_embedding is None:
        fuse_time_embedding = _in_kernel_sin_supported()

    vals = x[:, :, :D]
    mask = x[:, :, D:]
    B, T, _ = vals.shape

    # Hoisted, batch-invariant query path: project, pre-scale by 1/sqrt(ek),
    # then block-diagonalize per head -> (h*L, E).
    query_emb = learn_time_embedding(p["query"], p)                 # (L, E)
    qp = (query_emb @ p["wq"] + p["bq"]) * (1.0 / math.sqrt(ek))    # (L, E)
    L = qp.shape[0]
    head_id = (jnp.arange(E) // ek)[None, None, :]                  # (1, 1, E)
    qblk = jnp.where(head_id == jnp.arange(h)[:, None, None], qp[None], 0.0)
    qblk = qblk.reshape(h * L, E)                                   # (h*L, E)

    H = p["wo"].shape[1]
    Z = p["we"].shape[1]
    Z_pad = ((Z + 127) // 128) * 128
    we_pad = jnp.pad(p["we"], ((0, 0), (0, Z_pad - Z)))
    be_pad = jnp.pad(p["be"], ((0, 0), (0, Z_pad - Z)))

    # Batch-tile sizing: fill the MXU M dimension (target block_b*T >= 256 and
    # block_b*L >= 256), cap the unroll, and keep >= 2 grid tiles when B >= 2
    # so both v7x TensorCores (and megacore) get work.
    if block_b is None:
        bb = max(pl.cdiv(256, T), pl.cdiv(256, L))
        bb = min(bb, 128)
        if B >= 2:
            bb = min(bb, B // 2)
        block_b = max(1, bb)
    block_b = max(1, min(block_b, B))
    B_pad = pl.cdiv(B, block_b) * block_b
    if B_pad != B:
        # Padded batch rows have zero mask / values / time; their outputs are
        # finite garbage and are sliced off below (harmless by construction).
        pad3 = ((0, B_pad - B), (0, 0), (0, 0))
        vals = jnp.pad(vals, pad3)
        mask = jnp.pad(mask, pad3)
        time_steps = jnp.pad(time_steps, ((0, B_pad - B), (0, 0)))
    n_tiles = B_pad // block_b

    cdt = mxu_dtype
    # Fused values/mask slab: one input stream, one matmul RHS per segment.
    slab = jnp.concatenate([mask * vals, mask], axis=-1)
    slab = slab.reshape(B_pad * T, 2 * D).astype(cdt)

    kernel = functools.partial(_mtan_enc_kernel, num_heads=h, block_b=block_b,
                               fuse_time=fuse_time_embedding)

    args = [(qblk.astype(cdt), pl.BlockSpec((h * L, E), lambda b: (0, 0)))]
    if fuse_time_embedding:
        tcol = time_steps.reshape(B_pad * T, 1).astype(jnp.float32)
        tparams = jnp.stack([
            jnp.concatenate([p["w_lin"], p["w_per"]]),
            jnp.concatenate([p["b_lin"], p["b_per"]]),
        ], axis=0)                                                  # (2, E) f32
        args += [
            (tcol, pl.BlockSpec((block_b * T, 1), lambda b: (b, 0))),
            (tparams, pl.BlockSpec((2, E), lambda b: (0, 0))),
        ]
    else:
        key_emb = learn_time_embedding(time_steps, p)               # (B_pad, T, E)
        key2 = key_emb.reshape(B_pad * T, E).astype(cdt)
        args += [(key2, pl.BlockSpec((block_b * T, E), lambda b: (b, 0)))]
    args += [
        (slab, pl.BlockSpec((block_b * T, 2 * D), lambda b: (b, 0))),
        (p["wk"].astype(cdt), pl.BlockSpec((E, E), lambda b: (0, 0))),
        (p["bk"], pl.BlockSpec((1, E), lambda b: (0, 0))),
        (p["wo"].astype(cdt), pl.BlockSpec((h * D, H), lambda b: (0, 0))),
        (p["bo"], pl.BlockSpec((1, H), lambda b: (0, 0))),
        (we_pad.astype(cdt), pl.BlockSpec((H, Z_pad), lambda b: (0, 0))),
        (be_pad, pl.BlockSpec((1, Z_pad), lambda b: (0, 0))),
    ]
    arrays = [a for a, _ in args]
    in_specs = [s for _, s in args]

    out = pl.pallas_call(
        kernel,
        out_shape=jax.ShapeDtypeStruct((B_pad * L, Z_pad), jnp.float32),
        grid_spec=pltpu.PrefetchScalarGridSpec(
            num_scalar_prefetch=0,
            grid=(n_tiles,),
            in_specs=in_specs,
            out_specs=pl.BlockSpec((block_b * L, Z_pad), lambda b: (b, 0)),
            scratch_shapes=[pltpu.VMEM((block_b * L, h * D), cdt)],
        ),
        compiler_params=pltpu.CompilerParams(
            dimension_semantics=("parallel",),
            # 48 MiB: leaves headroom under v7x's 64 MiB physical VMEM; well
            # within v5e/v6e's 128 MiB.  Actual per-tile footprint here is
            # far smaller even at block_b=128.
            vmem_limit_bytes=48 * 1024 * 1024,
        ),
    )(*arrays)

    return out.reshape(B_pad, L, Z_pad)[:B, :, :Z]


# ----------------------------------------------------------------------------
# Pure-JAX reference (mirrors the PyTorch semantics) for a correctness check.
# ----------------------------------------------------------------------------
def ref_forward(x, time_steps, p):
    D = p["input_dim"]; h = p["num_heads"]; E = p["embed_time"]
    ek = E // h
    vals = x[:, :, :D]
    mask = x[:, :, D:]
    key_emb = learn_time_embedding(time_steps, p)                # (B, T, E)
    query_emb = learn_time_embedding(p["query"][None, :], p)     # (1, L, E)
    qp = query_emb @ p["wq"] + p["bq"]
    kp = key_emb @ p["wk"] + p["bk"]
    B, T, _ = key_emb.shape
    L = query_emb.shape[1]
    qh = qp.reshape(1, L, h, ek).transpose(0, 2, 1, 3)[0]        # (h, L, ek)
    kh = kp.reshape(B, T, h, ek).transpose(0, 2, 1, 3)           # (B, h, T, ek)
    scores = jnp.einsum("hle,bhte->bhlt", qh, kh) / math.sqrt(ek)
    scores5 = jnp.repeat(scores[..., None], D, axis=-1)          # (B, h, L, T, D)
    maskb = mask[:, None, None, :, :]
    scores5 = jnp.where(maskb == 0, jnp.float32(-1e9), scores5)
    pattn = jax.nn.softmax(scores5, axis=-2)
    out = jnp.sum(pattn * vals[:, None, None, :, :], axis=-2)    # (B, h, L, D)
    out = out.transpose(0, 2, 1, 3).reshape(B, L, h * D)
    attn = out @ p["wo"] + p["bo"]
    return attn @ p["we"] + p["be"]


if __name__ == "__main__":
    B, T, D = 2, 8, 4          # batch, observed time points, input_dim
    E, NUM_HEADS = 16, 1       # embed_time, num_heads
    L, NH, Z = 8, 32, 16       # reference time points, mTAN hidden, encoder latent

    key = jax.random.PRNGKey(0)
    kparam, kx, kmask, kt, kx2, kmask2, kt2 = jax.random.split(key, 7)
    params = init_params(kparam, input_dim=D, embed_time=E, num_heads=NUM_HEADS,
                         nhidden=NH, latent_dim=Z, num_ref=L)

    def make_data(kv, km, ks, b):
        v = jax.random.normal(kv, (b, T, D), jnp.float32)
        obs = (jax.random.uniform(km, (b, T, D)) > 0.3).astype(jnp.float32)
        xx = jnp.concatenate([v * obs, obs], axis=-1)            # (b, T, 2*D)
        ts = jnp.sort(jax.random.uniform(ks, (b, T)), axis=-1)
        return xx, ts

    x, time_steps = make_data(kx, kmask, kt, B)
    ref = ref_forward(x, time_steps, params)

    # 1) exact f32 MXU path, streamed (non-fused) time embedding, one batch
    #    element per tile (grid of 2 tiles).
    out1 = enc_mtan_pretrain_forward(x, time_steps, params, block_b=1,
                                     mxu_dtype=jnp.float32,
                                     fuse_time_embedding=False)
    out1 = jax.block_until_ready(out1)
    assert out1.shape == (B, L, Z)
    assert jnp.allclose(out1, ref, atol=1e-2, rtol=1e-2), \
        float(jnp.max(jnp.abs(out1 - ref)))

    # 2) exact f32 path, both batch elements folded into one tile, auto
    #    (in-kernel if supported) time embedding.
    out2 = enc_mtan_pretrain_forward(x, time_steps, params, block_b=2,
                                     mxu_dtype=jnp.float32)
    out2 = jax.block_until_ready(out2)
    assert jnp.allclose(out2, ref, atol=1e-2, rtol=1e-2), \
        float(jnp.max(jnp.abs(out2 - ref)))

    # 3) default fast path: bf16 MXU operands, f32 softmax math.
    out3 = jax.block_until_ready(enc_mtan_pretrain_forward(x, time_steps, params))
    assert out3.shape == (B, L, Z)
    assert jnp.allclose(out3, ref, atol=1e-1, rtol=1e-1), \
        float(jnp.max(jnp.abs(out3 - ref)))

    # 4) odd batch: exercises the batch-padding path and the default
    #    multi-tile heuristic (block_b=2, 3 grid tiles).
    x5, ts5 = make_data(kx2, kmask2, kt2, 5)
    ref5 = ref_forward(x5, ts5, params)
    out4 = jax.block_until_ready(enc_mtan_pretrain_forward(x5, ts5, params))
    assert out4.shape == (5, L, Z)
    assert jnp.allclose(out4, ref5, atol=1e-1, rtol=1e-1), \
        float(jnp.max(jnp.abs(out4 - ref5)))

    print("KERNEL_OK")
</pallas_src>

<mosaic_0001>
module attributes {stable_mosaic.version = 11 : i64} {
  func.func @_mtan_enc_kernel(%arg0: i32, %arg1: memref<8x16xf32, #tpu.memory_space<vmem>>, %arg2: memref<8x16xf32, #tpu.memory_space<vmem>>, %arg3: memref<8x8xf32, #tpu.memory_space<vmem>>, %arg4: memref<16x16xf32, #tpu.memory_space<vmem>>, %arg5: memref<1x16xf32, #tpu.memory_space<vmem>>, %arg6: memref<4x32xf32, #tpu.memory_space<vmem>>, %arg7: memref<1x32xf32, #tpu.memory_space<vmem>>, %arg8: memref<32x128xf32, #tpu.memory_space<vmem>>, %arg9: memref<1x128xf32, #tpu.memory_space<vmem>>, %arg10: memref<8x128xf32, #tpu.memory_space<vmem>>, %arg11: memref<8x4xf32, #tpu.memory_space<vmem>>) attributes {dimension_semantics = [#tpu.dimension_semantics<parallel>], iteration_bounds = array<i64: 2>, scalar_prefetch = 0 : i64, scratch_operands = 1 : i64, tpu.core_type = #tpu.core_type<tc>, window_params = [{pipeline_mode = #tpu.pipeline_mode<synchronous>, transform_indices = @transform_0, window_bounds = array<i64: 8, 16>}, {transform_indices = @transform_1, window_bounds = array<i64: 8, 16>}, {transform_indices = @transform_2, window_bounds = array<i64: 8, 8>}, {pipeline_mode = #tpu.pipeline_mode<synchronous>, transform_indices = @transform_3, window_bounds = array<i64: 16, 16>}, {pipeline_mode = #tpu.pipeline_mode<synchronous>, transform_indices = @transform_4, window_bounds = array<i64: 1, 16>}, {pipeline_mode = #tpu.pipeline_mode<synchronous>, transform_indices = @transform_5, window_bounds = array<i64: 4, 32>}, {pipeline_mode = #tpu.pipeline_mode<synchronous>, transform_indices = @transform_6, window_bounds = array<i64: 1, 32>}, {pipeline_mode = #tpu.pipeline_mode<synchronous>, transform_indices = @transform_7, window_bounds = array<i64: 32, 128>}, {pipeline_mode = #tpu.pipeline_mode<synchronous>, transform_indices = @transform_8, window_bounds = array<i64: 1, 128>}, {transform_indices = @transform_9, window_bounds = array<i64: 8, 128>}]} {
    %c0 = arith.constant 0 : index
    %c0_0 = arith.constant 0 : index
    %0 = vector.load %arg2[%c0, %c0_0] : memref<8x16xf32, #tpu.memory_space<vmem>>, vector<8x16xf32>
    %c0_1 = arith.constant 0 : index
    %c0_2 = arith.constant 0 : index
    %1 = vector.load %arg4[%c0_1, %c0_2] : memref<16x16xf32, #tpu.memory_space<vmem>>, vector<16x16xf32>
    %cst = arith.constant dense<0.000000e+00> : vector<8x16xf32>
    %2 = tpu.matmul %0, %1, %cst {dimension_numbers = #tpu.dot_dimension_numbers<[1], [0], [0], [1], [0, 0, 1, 1], [], []>} : vector<8x16xf32>, vector<16x16xf32>, vector<8x16xf32> -> vector<8x16xf32>
    %c0_3 = arith.constant 0 : index
    %c0_4 = arith.constant 0 : index
    %3 = vector.load %arg5[%c0_3, %c0_4] : memref<1x16xf32, #tpu.memory_space<vmem>>, vector<1x16xf32>
    %4 = vector.broadcast %3 : vector<1x16xf32> to vector<8x16xf32>
    %5 = arith.addf %2, %4 : vector<8x16xf32>
    %c0_5 = arith.constant 0 : index
    %c0_6 = arith.constant 0 : index
    %6 = vector.load %arg1[%c0_5, %c0_6] : memref<8x16xf32, #tpu.memory_space<vmem>>, vector<8x16xf32>
    %cst_7 = arith.constant dense<0.000000e+00> : vector<8x8xf32>
    %7 = tpu.matmul %6, %5, %cst_7 {dimension_numbers = #tpu.dot_dimension_numbers<[1], [1], [0], [0], [0, 0, 1, 0], [], []>} : vector<8x16xf32>, vector<8x16xf32>, vector<8x8xf32> -> vector<8x8xf32>
    %c0_8 = arith.constant 0 : index
    %c0_9 = arith.constant 0 : index
    %8 = vector.load %arg3[%c0_8, %c0_9] : memref<8x8xf32, #tpu.memory_space<vmem>>, vector<8x8xf32>
    %cst_10 = arith.constant dense<0xFF800000> : vector<8xf32>
    %9 = vector.multi_reduction <maximumf>, %7, %cst_10 [1] : vector<8x8xf32> to vector<8xf32>
    %10 = vector.shape_cast %9 : vector<8xf32> to vector<8x1xf32>
    %11 = vector.broadcast %10 : vector<8x1xf32> to vector<8x8xf32>
    %12 = arith.subf %7, %11 : vector<8x8xf32>
    %13 = math.exp %12 : vector<8x8xf32>
    %cst_11 = arith.constant dense<0.000000e+00> : vector<8x8xf32>
    %14 = tpu.matmul %13, %8, %cst_11 {dimension_numbers = #tpu.dot_dimension_numbers<[1], [0], [0], [1], [0, 0, 1, 1], [], []>} : vector<8x8xf32>, vector<8x8xf32>, vector<8x8xf32> -> vector<8x8xf32>
    %15 = vector.extract_strided_slice %14 {offsets = [0, 0], sizes = [8, 4], strides = [1, 1]} : vector<8x8xf32> to vector<8x4xf32>
    %16 = vector.extract_strided_slice %14 {offsets = [0, 4], sizes = [8, 4], strides = [1, 1]} : vector<8x8xf32> to vector<8x4xf32>
    %cst_12 = arith.constant 0.000000e+00 : f32
    %17 = vector.broadcast %cst_12 : f32 to vector<8x4xf32>
    %18 = arith.cmpf ogt, %16, %17 : vector<8x4xf32>
    %cst_13 = arith.constant 1.000000e+00 : f32
    %19 = vector.broadcast %cst_13 : f32 to vector<8x4xf32>
    %20 = arith.select %18, %16, %19 : vector<8x4xi1>, vector<8x4xf32>
    %21 = arith.divf %15, %20 : vector<8x4xf32>
    %c0_14 = arith.constant 0 : index
    %c0_15 = arith.constant 0 : index
    %22 = vector.load %arg11[%c0_14, %c0_15] : memref<8x4xf32, #tpu.memory_space<vmem>>, vector<8x4xf32>
    tpu.vector_store %arg11[%c0_14, %c0_15], %21 {strides = array<i32>} : memref<8x4xf32, #tpu.memory_space<vmem>>, vector<8x4xf32>,
    %c0_16 = arith.constant 0 : index
    %c0_17 = arith.constant 0 : index
    %23 = vector.load %arg11[%c0_16, %c0_17] : memref<8x4xf32, #tpu.memory_space<vmem>>, vector<8x4xf32>
    %c0_18 = arith.constant 0 : index
    %c0_19 = arith.constant 0 : index
    %24 = vector.load %arg6[%c0_18, %c0_19] : memref<4x32xf32, #tpu.memory_space<vmem>>, vector<4x32xf32>
    %cst_20 = arith.constant dense<0.000000e+00> : vector<8x32xf32>
    %25 = tpu.matmul %23, %24, %cst_20 {dimension_numbers = #tpu.dot_dimension_numbers<[1], [0], [0], [1], [0, 0, 1, 1], [], []>} : vector<8x4xf32>, vector<4x32xf32>, vector<8x32xf32> -> vector<8x32xf32>
    %c0_21 = arith.constant 0 : index
    %c0_22 = arith.constant 0 : index
    %26 = vector.load %arg7[%c0_21, %c0_22] : memref<1x32xf32, #tpu.memory_space<vmem>>, vector<1x32xf32>
    %27 = vector.broadcast %26 : vector<1x32xf32> to vector<8x32xf32>
    %28 = arith.addf %25, %27 : vector<8x32xf32>
    %c0_23 = arith.constant 0 : index
    %c0_24 = arith.constant 0 : index
    %29 = vector.load %arg8[%c0_23, %c0_24] : memref<32x128xf32, #tpu.memory_space<vmem>>, vector<32x128xf32>
    %cst_25 = arith.constant dense<0.000000e+00> : vector<8x128xf32>
    %30 = tpu.matmul %28, %29, %cst_25 {dimension_numbers = #tpu.dot_dimension_numbers<[1], [0], [0], [1], [0, 0, 1, 1], [], []>} : vector<8x32xf32>, vector<32x128xf32>, vector<8x128xf32> -> vector<8x128xf32>
    %c0_26 = arith.constant 0 : index
    %c0_27 = arith.constant 0 : index
    %31 = vector.load %arg9[%c0_26, %c0_27] : memref<1x128xf32, #tpu.memory_space<vmem>>, vector<1x128xf32>
    %32 = vector.broadcast %31 : vector<1x128xf32> to vector<8x128xf32>
    %33 = arith.addf %30, %32 : vector<8x128xf32>
    %c0_28 = arith.constant 0 : index
    %c0_29 = arith.constant 0 : index
    %34 = vector.load %arg10[%c0_28, %c0_29] : memref<8x128xf32, #tpu.memory_space<vmem>>, vector<8x128xf32>
    tpu.vector_store %arg10[%c0_28, %c0_29], %33 {strides = array<i32>} : memref<8x128xf32, #tpu.memory_space<vmem>>, vector<8x128xf32>,
    return
  }
  func.func @transform_0(%arg0: i32) -> (i32, i32) {
    %c0_i32 = arith.constant 0 : i32
    %c0_i32_0 = arith.constant 0 : i32
    %c0_i32_1 = arith.constant 0 : i32
    return %c0_i32, %c0_i32_0 : i32, i32
  }
  func.func @transform_1(%arg0: i32) -> (i32, i32) {
    %c0_i32 = arith.constant 0 : i32
    %c0_i32_0 = arith.constant 0 : i32
    return %arg0, %c0_i32 : i32, i32
  }
  func.func @transform_2(%arg0: i32) -> (i32, i32) {
    %c0_i32 = arith.constant 0 : i32
    %c0_i32_0 = arith.constant 0 : i32
    return %arg0, %c0_i32 : i32, i32
  }
  func.func @transform_3(%arg0: i32) -> (i32, i32) {
    %c0_i32 = arith.constant 0 : i32
    %c0_i32_0 = arith.constant 0 : i32
    %c0_i32_1 = arith.constant 0 : i32
    return %c0_i32, %c0_i32_0 : i32, i32
  }
  func.func @transform_4(%arg0: i32) -> (i32, i32) {
    %c0_i32 = arith.constant 0 : i32
    %c0_i32_0 = arith.constant 0 : i32
    %c0_i32_1 = arith.constant 0 : i32
    return %c0_i32, %c0_i32_0 : i32, i32
  }
  func.func @transform_5(%arg0: i32) -> (i32, i32) {
    %c0_i32 = arith.constant 0 : i32
    %c0_i32_0 = arith.constant 0 : i32
    %c0_i32_1 = arith.constant 0 : i32
    return %c0_i32, %c0_i32_0 : i32, i32
  }
  func.func @transform_6(%arg0: i32) -> (i32, i32) {
    %c0_i32 = arith.constant 0 : i32
    %c0_i32_0 = arith.constant 0 : i32
    %c0_i32_1 = arith.constant 0 : i32
    return %c0_i32, %c0_i32_0 : i32, i32
  }
  func.func @transform_7(%arg0: i32) -> (i32, i32) {
    %c0_i32 = arith.constant 0 : i32
    %c0_i32_0 = arith.constant 0 : i32
    %c0_i32_1 = arith.constant 0 : i32
    return %c0_i32, %c0_i32_0 : i32, i32
  }
  func.func @transform_8(%arg0: i32) -> (i32, i32) {
    %c0_i32 = arith.constant 0 : i32
    %c0_i32_0 = arith.constant 0 : i32
    %c0_i32_1 = arith.constant 0 : i32
    return %c0_i32, %c0_i32_0 : i32, i32
  }
  func.func @transform_9(%arg0: i32) -> (i32, i32) {
    %c0_i32 = arith.constant 0 : i32
    %c0_i32_0 = arith.constant 0 : i32
    return %arg0, %c0_i32 : i32, i32
  }
}

</mosaic_0001>

<llo_original>
// kernel: tpu_custom_call.1
$region0: #{tpu_custom_call.1}
  #allocation0 [shape = 'u32[]', space=smem, size = 0x4, offset = 0x4, fixed_abs, tag = 'smem constant byte address 0x4 - core index']
  #allocation1 [shape = 'u32[72,128]{1,0:T(1,128)}', space=vmem, size = 0x9000, scoped, tag = 'internal scratch']
  #allocation2 [shape = 'f32[8,4]{1,0:T(8,128)}', space=vmem, size = 0x1000, scoped, tag = 'scratch operand']
  %s0 = inlined_call_operand.vmem [shape: f32[8,16], index: 0, kind: input, shape index: {}]
  %s1 = inlined_call_operand.vmem [shape: f32[16,16], index: 1, kind: input, shape index: {}]
  %s2 = inlined_call_operand.vmem [shape: f32[16,8], index: 2, kind: input, shape index: {}]
  %s3 = inlined_call_operand.hbm [shape: f32[16,16], index: 3, kind: input, shape index: {}]
  %s4 = inlined_call_operand.hbm [shape: f32[1,16], index: 4, kind: input, shape index: {}]
  %s5 = inlined_call_operand.vmem [shape: f32[4,32], index: 5, kind: input, shape index: {}]
  %s6 = inlined_call_operand.vmem [shape: f32[1,32], index: 6, kind: input, shape index: {}]
  %s7 = inlined_call_operand.hbm [shape: f32[32,128], index: 7, kind: input, shape index: {}]
  %s8 = inlined_call_operand.vmem [shape: f32[1,128], index: 8, kind: input, shape index: {}]
  %s9 = inlined_call_operand.hbm [shape: f32[16,128], index: 9, kind: output, shape index: {}]
  %s10 = sld [smem:[#allocation0]]
  $region81: #{tpu_custom_call.1} parent=0
    _
  %s12 = ssub.s32 1, %s10
  %s13 = scalar_select 0, %s12, %s10
  $region1: #{tpu_custom_call.1} parent=0
    #allocation3 [shape = 'u8[8192]{0}', space=vmem, size = 0x2000, scoped, tag = 'input window, operand 3, single buffered']
    #allocation4 [shape = 's32[2]{0}', space=sflag, size = 0x8, scoped, tag = 'scoped memory for tpu_custom_call.1']
    #allocation5 [shape = 's32[2]{0}', space=sflag, size = 0x8, scoped, tag = 'scoped memory for tpu_custom_call.1']
    #allocation6 [shape = 'u8[512]{0}', space=vmem, size = 0x400, scoped, tag = 'input window, operand 4, single buffered']
    #allocation7 [shape = 's32[1]{0}', space=sflag, size = 0x4, scoped, tag = 'scoped memory for tpu_custom_call.1']
    #allocation8 [shape = 'u8[16384]{0}', space=vmem, size = 0x4000, scoped, tag = 'input window, operand 7, single buffered']
    #allocation9 [shape = 'u8[8192]{0}', space=vmem, size = 0x2000, scoped, tag = 'output window, operand 0']
    %14 = vsyncpa [#allocation4], 0
    %15 = vsyncpa [#allocation7], 0
    %16 = vsyncpa [#allocation5], 0
    %s17 = scalar_lea.sflag [#allocation5], 1
    %18 = vsyncpa %s17, 0
    loop: start=0, step=1, limit=4
    $region2: #{tpu_custom_call.1} parent=1 // loop_pre_header
      _
    $region3: #{tpu_custom_call.1} parent=1 // loop_header
      %s20 = sphi 0, %s24
      %p21 = scmp.ge.s32.totalorder %s20, 4
      %s28 = sphi 0, %s28
      %s30 = sphi 0, %s28
      %s31 = sphi 0, %s30
      %s45 = sphi 0, %s31
      %s51 = sphi 0, %s53
      %s54 = sphi 0, %s51
      %s55 = sphi 0, %s54
      %s71 = sphi 0, %s55
      %s77 = sphi 0, %s79
      %s80 = sphi 0, %s77
      %s81 = sphi 0, %s80
      %s97 = sphi 0, %s81
      %s101 = sphi 0, %s101
      %s103 = sphi 0, %s101
      %s104 = sphi 0, %s103
      %s118 = sphi 0, %s104
      %s122 = sphi 0, %s122
      %s124 = sphi 0, %s122
      %s125 = sphi 0, %s124
      %s139 = sphi 0, %s125
      %s143 = sphi 0, %s143
      %s145 = sphi 0, %s143
      %s146 = sphi 0, %s145
      %s160 = sphi 0, %s146
      %s164 = sphi 0, %s164
      %s166 = sphi 0, %s164
      %s167 = sphi 0, %s166
      %s181 = sphi 0, %s167
      %s185 = sphi 0, %s185
      %s187 = sphi 0, %s185
      %s188 = sphi 0, %s187
      %s202 = sphi 0, %s188
      %s206 = sphi 0, %s206
      %s208 = sphi 0, %s206
      %s209 = sphi 0, %s208
      %s223 = sphi 0, %s209
      %s229 = sphi 0, %s231
      %s232 = sphi 0, %s229
      %s233 = sphi 0, %s232
      %s249 = sphi 0, %s233
    $region4: #{tpu_custom_call.1} parent=1 // loop_header_branch
      %23 = sbr.rel (%p21) target = $region8
    $region5: #{tpu_custom_call.1} parent=1 // loop_body
      %s25 = ssub.s32 %s20, 1
      %s26 = ssub.s32 %s20, 2
      %s27 = sadd.s32 %s20, 1
      %s29 = sadd.s32 %s28, 1
      %p32 = scmp.eq.s32.totalorder %s20, 1
      %p33 = scmp.ne.s32.totalorder %s28, %s30
      %p34 = scmp.eq.s32.totalorder %s20, 0
      %p35 = por %p33, %p34
      %p36 = scmp.ne.s32.totalorder %s28, %s30
      %p37 = scmp.eq.s32.totalorder %s25, 1
      %p38 = por %p36, %p37
      %p39 = scmp.ne.s32.totalorder %s30, %s31
      %p40 = scmp.eq.s32.totalorder %s25, 0
      %p41 = por %p39, %p40
      %p42 = scmp.ne.s32.totalorder %s30, %s31
      %p43 = scmp.eq.s32.totalorder %s26, 1
      %p44 = por %p42, %p43
      %p46 = scmp.ne.s32.totalorder %s31, %s45
      %p47 = scmp.eq.s32.totalorder %s26, 0
      %p48 = por %p46, %p47
      %s49 = ssub.s32 %s20, %s27
      %p50 = scmp.eq.s32.totalorder %s49, 0
      %s52 = sadd.s32 %s51, 1
      %s53 = scalar_select %p50, %s51, %s52
      %p56 = pneg %p50
      %p57 = scmp.eq.s32.totalorder %s20, 1
      %p58 = por %p56, %p57
      %p59 = scmp.ne.s32.totalorder %s51, %s54
      %p60 = scmp.eq.s32.totalorder %s20, 0
      %p61 = por %p59, %p60
      %p62 = scmp.ne.s32.totalorder %s51, %s54
      %p63 = scmp.eq.s32.totalorder %s25, 1
      %p64 = por %p62, %p63
      %p65 = scmp.ne.s32.totalorder %s54, %s55
      %p66 = scmp.eq.s32.totalorder %s25, 0
      %p67 = por %p65, %p66
      %p68 = scmp.ne.s32.totalorder %s54, %s55
      %p69 = scmp.eq.s32.totalorder %s26, 1
      %p70 = por %p68, %p69
      %p72 = scmp.ne.s32.totalorder %s55, %s71
      %p73 = scmp.eq.s32.totalorder %s26, 0
      %p74 = por %p72, %p73
      %s75 = ssub.s32 %s20, %s27
      %p76 = scmp.eq.s32.totalorder %s75, 0
      %s78 = sadd.s32 %s77, 1
      %s79 = scalar_select %p76, %s77, %s78
      %p82 = pneg %p76
      %p83 = scmp.eq.s32.totalorder %s20, 1
      %p84 = por %p82, %p83
      %p85 = scmp.ne.s32.totalorder %s77, %s80
      %p86 = scmp.eq.s32.totalorder %s20, 0
      %p87 = por %p85, %p86
      %p88 = scmp.ne.s32.totalorder %s77, %s80
      %p89 = scmp.eq.s32.totalorder %s25, 1
      %p90 = por %p88, %p89
      %p91 = scmp.ne.s32.totalorder %s80, %s81
      %p92 = scmp.eq.s32.totalorder %s25, 0
      %p93 = por %p91, %p92
      %p94 = scmp.ne.s32.totalorder %s80, %s81
      %p95 = scmp.eq.s32.totalorder %s26, 1
      %p96 = por %p94, %p95
      %p98 = scmp.ne.s32.totalorder %s81, %s97
      %p99 = scmp.eq.s32.totalorder %s26, 0
      %p100 = por %p98, %p99
      %s102 = sadd.s32 %s101, 1
      %p105 = scmp.eq.s32.totalorder %s20, 1
      %p106 = scmp.ne.s32.totalorder %s101, %s103
      %p107 = scmp.eq.s32.totalorder %s20, 0
      %p108 = por %p106, %p107
      %p109 = scmp.ne.s32.totalorder %s101, %s103
      %p110 = scmp.eq.s32.totalorder %s25, 1
      %p111 = por %p109, %p110
      %p112 = scmp.ne.s32.totalorder %s103, %s104
      %p113 = scmp.eq.s32.totalorder %s25, 0
      %p114 = por %p112, %p113
      %p115 = scmp.ne.s32.totalorder %s103, %s104
      %p116 = scmp.eq.s32.totalorder %s26, 1
      %p117 = por %p115, %p116
      %p119 = scmp.ne.s32.totalorder %s104, %s118
      %p120 = scmp.eq.s32.totalorder %s26, 0
      %p121 = por %p119, %p120
      %s123 = sadd.s32 %s122, 1
      %p126 = scmp.eq.s32.totalorder %s20, 1
      %p127 = scmp.ne.s32.totalorder %s122, %s124
      %p128 = scmp.eq.s32.totalorder %s20, 0
      %p129 = por %p127, %p128
      %p130 = scmp.ne.s32.totalorder %s122, %s124
      %p131 = scmp.eq.s32.totalorder %s25, 1
      %p132 = por %p130, %p131
      %p133 = scmp.ne.s32.totalorder %s124, %s125
      %p134 = scmp.eq.s32.totalorder %s25, 0
      %p135 = por %p133, %p134
      %p136 = scmp.ne.s32.totalorder %s124, %s125
      %p137 = scmp.eq.s32.totalorder %s26, 1
      %p138 = por %p136, %p137
      %p140 = scmp.ne.s32.totalorder %s125, %s139
      %p141 = scmp.eq.s32.totalorder %s26, 0
      %p142 = por %p140, %p141
      %s144 = sadd.s32 %s143, 1
      %p147 = scmp.eq.s32.totalorder %s20, 1
      %p148 = scmp.ne.s32.totalorder %s143, %s145
      %p149 = scmp.eq.s32.totalorder %s20, 0
      %p150 = por %p148, %p149
      %p151 = scmp.ne.s32.totalorder %s143, %s145
      %p152 = scmp.eq.s32.totalorder %s25, 1
      %p153 = por %p151, %p152
      %p154 = scmp.ne.s32.totalorder %s145, %s146
      %p155 = scmp.eq.s32.totalorder %s25, 0
      %p156 = por %p154, %p155
      %p157 = scmp.ne.s32.totalorder %s145, %s146
      %p158 = scmp.eq.s32.totalorder %s26, 1
      %p159 = por %p157, %p158
      %p161 = scmp.ne.s32.totalorder %s146, %s160
      %p162 = scmp.eq.s32.totalorder %s26, 0
      %p163 = por %p161, %p162
      %s165 = sadd.s32 %s164, 1
      %p168 = scmp.eq.s32.totalorder %s20, 1
      %p169 = scmp.ne.s32.totalorder %s164, %s166
      %p170 = scmp.eq.s32.totalorder %s20, 0
      %p171 = por %p169, %p170
      %p172 = scmp.ne.s32.totalorder %s164, %s166
      %p173 = scmp.eq.s32.totalorder %s25, 1
      %p174 = por %p172, %p173
      %p175 = scmp.ne.s32.totalorder %s166, %s167
      %p176 = scmp.eq.s32.totalorder %s25, 0
      %p177 = por %p175, %p176
      %p178 = scmp.ne.s32.totalorder %s166, %s167
      %p179 = scmp.eq.s32.totalorder %s26, 1
      %p180 = por %p178, %p179
      %p182 = scmp.ne.s32.totalorder %s167, %s181
      %p183 = scmp.eq.s32.totalorder %s26, 0
      %p184 = por %p182, %p183
      %s186 = sadd.s32 %s185, 1
      %p189 = scmp.eq.s32.totalorder %s20, 1
      %p190 = scmp.ne.s32.totalorder %s185, %s187
      %p191 = scmp.eq.s32.totalorder %s20, 0
      %p192 = por %p190, %p191
      %p193 = scmp.ne.s32.totalorder %s185, %s187
      %p194 = scmp.eq.s32.totalorder %s25, 1
      %p195 = por %p193, %p194
      %p196 = scmp.ne.s32.totalorder %s187, %s188
      %p197 = scmp.eq.s32.totalorder %s25, 0
      %p198 = por %p196, %p197
      %p199 = scmp.ne.s32.totalorder %s187, %s188
      %p200 = scmp.eq.s32.totalorder %s26, 1
      %p201 = por %p199, %p200
      %p203 = scmp.ne.s32.totalorder %s188, %s202
      %p204 = scmp.eq.s32.totalorder %s26, 0
      %p205 = por %p203, %p204
      %s207 = sadd.s32 %s206, 1
      %p210 = scmp.eq.s32.totalorder %s20, 1
      %p211 = scmp.ne.s32.totalorder %s206, %s208
      %p212 = scmp.eq.s32.totalorder %s20, 0
      %p213 = por %p211, %p212
      %p214 = scmp.ne.s32.totalorder %s206, %s208
      %p215 = scmp.eq.s32.totalorder %s25, 1
      %p216 = por %p214, %p215
      %p217 = scmp.ne.s32.totalorder %s208, %s209
      %p218 = scmp.eq.s32.totalorder %s25, 0
      %p219 = por %p217, %p218
      %p220 = scmp.ne.s32.totalorder %s208, %s209
      %p221 = scmp.eq.s32.totalorder %s26, 1
      %p222 = por %p220, %p221
      %p224 = scmp.ne.s32.totalorder %s209, %s223
      %p225 = scmp.eq.s32.totalorder %s26, 0
      %p226 = por %p224, %p225
      %s227 = ssub.s32 %s20, %s27
      %p228 = scmp.eq.s32.totalorder %s227, 0
      %s230 = sadd.s32 %s229, 1
      %s231 = scalar_select %p228, %s229, %s230
      %p234 = pneg %p228
      %p235 = scmp.eq.s32.totalorder %s20, 1
      %p236 = por %p234, %p235
      %p237 = scmp.ne.s32.totalorder %s229, %s232
      %p238 = scmp.eq.s32.totalorder %s20, 0
      %p239 = por %p237, %p238
      %p240 = scmp.ne.s32.totalorder %s229, %s232
      %p241 = scmp.eq.s32.totalorder %s25, 1
      %p242 = por %p240, %p241
      %p243 = scmp.ne.s32.totalorder %s232, %s233
      %p244 = scmp.eq.s32.totalorder %s25, 0
      %p245 = por %p243, %p244
      %p246 = scmp.ne.s32.totalorder %s232, %s233
      %p247 = scmp.eq.s32.totalorder %s26, 1
      %p248 = por %p246, %p247
      %p250 = scmp.ne.s32.totalorder %s233, %s249
      %p251 = scmp.eq.s32.totalorder %s26, 0
      %p252 = por %p250, %p251
      %p253 = scmp.le.s32.totalorder 1, %s20
      %p254 = scmp.lt.s32.totalorder %s20, 3
      %p255 = pnand %p253, %p254
      %p256 = pneg %p255
      // Predicated region
      $region9: #{tpu_custom_call.1} parent=5 // pred_check
        _
      $region10: #{tpu_custom_call.1} parent=5 // pred_check_branch
        %258 = sbr.rel (%p255) target = $region12
      $region11: #{tpu_custom_call.1} parent=5 // pred_region
        %s259 = ssub.s32 %s20, 1
        // Predicated region
        $region13: #{tpu_custom_call.1} parent=11 // pred_check
          %p260 = pneg %p41
        $region14: #{tpu_custom_call.1} parent=11 // pred_check_branch
          %262 = sbr.rel (%p260) target = $region16
        $region15: #{tpu_custom_call.1} parent=11 // pred_region
          _
        $region16: #{tpu_custom_call.1} parent=11 // pred_fallthru
          _
        // Predicated region
        $region17: #{tpu_custom_call.1} parent=11 // pred_check
          %p263 = pneg %p114
        $region18: #{tpu_custom_call.1} parent=11 // pred_check_branch
          %265 = sbr.rel (%p263) target = $region20
        $region19: #{tpu_custom_call.1} parent=11 // pred_region
          %267 = vsyncadd [#allocation4], 0
          %s268 = sshll.u32 %s3, 4
          %s269 = int_to_ptr.hbm [resolvable:$true] %s268
          %s270 = sshll.u32 [#allocation3], 4
          %s271 = int_to_ptr.vmem [resolvable:$true] %s270
          %276 = dma.hbm_to_vmem [thread:$0]  %s269, 256, %s271, [#allocation4], 128, 128, 8
        $region20: #{tpu_custom_call.1} parent=11 // pred_fallthru
          _
        // Predicated region
        $region21: #{tpu_custom_call.1} parent=11 // pred_check
          %p277 = pneg %p135
        $region22: #{tpu_custom_call.1} parent=11 // pred_check_branch
          %279 = sbr.rel (%p277) target = $region24
        $region23: #{tpu_custom_call.1} parent=11 // pred_region
          %281 = vsyncadd [#allocation7], 0
          %s283 = sshll.u32 %s4, 4
          %s284 = int_to_ptr.hbm [resolvable:$true] %s283
          %s285 = sshll.u32 [#allocation6], 4
          %s286 = int_to_ptr.vmem [resolvable:$true] %s285
          %288 = dma.hbm_to_vmem [thread:$0]  %s284, 16, %s286, [#allocation7]
        $region24: #{tpu_custom_call.1} parent=11 // pred_fallthru
          _
        // Predicated region
        $region25: #{tpu_custom_call.1} parent=11 // pred_check
          %p289 = pneg %p156
        $region26: #{tpu_custom_call.1} parent=11 // pred_check_branch
          %291 = sbr.rel (%p289) target = $region28
        $region27: #{tpu_custom_call.1} parent=11 // pred_region
          _
        $region28: #{tpu_custom_call.1} parent=11 // pred_fallthru
          _
        // Predicated region
        $region29: #{tpu_custom_call.1} parent=11 // pred_check
          %p292 = pneg %p177
        $region30: #{tpu_custom_call.1} parent=11 // pred_check_branch
          %294 = sbr.rel (%p292) target = $region32
        $region31: #{tpu_custom_call.1} parent=11 // pred_region
          _
        $region32: #{tpu_custom_call.1} parent=11 // pred_fallthru
          _
        // Predicated region
        $region33: #{tpu_custom_call.1} parent=11 // pred_check
          %p295 = pneg %p198
        $region34: #{tpu_custom_call.1} parent=11 // pred_check_branch
          %297 = sbr.rel (%p295) target = $region36
        $region35: #{tpu_custom_call.1} parent=11 // pred_region
          %299 = vsyncadd [#allocation7], 0
          %s300 = sshll.u32 %s7, 4
          %s301 = int_to_ptr.hbm [resolvable:$true] %s300
          %s302 = sshll.u32 [#allocation8], 4
          %s303 = int_to_ptr.vmem [resolvable:$true] %s302
          %308 = dma.hbm_to_vmem [thread:$0]  %s301, 512, %s303, [#allocation7], 128, 128, 8
        $region36: #{tpu_custom_call.1} parent=11 // pred_fallthru
          _
        // Predicated region
        $region37: #{tpu_custom_call.1} parent=11 // pred_check
          %p309 = pneg %p219
        $region38: #{tpu_custom_call.1} parent=11 // pred_check_branch
          %311 = sbr.rel (%p309) target = $region40
        $region39: #{tpu_custom_call.1} parent=11 // pred_region
          _
        $region40: #{tpu_custom_call.1} parent=11 // pred_fallthru
          _
      $region12: #{tpu_custom_call.1} parent=5 // pred_fallthru
        _
      %p312 = scmp.lt.s32.totalorder %s20, 2
      // Predicated region
      $region41: #{tpu_custom_call.1} parent=5 // pred_check
        %p313 = pneg %p312
      $region42: #{tpu_custom_call.1} parent=5 // pred_check_branch
        %315 = sbr.rel (%p313) target = $region44
      $region43: #{tpu_custom_call.1} parent=5 // pred_region
        // Predicated region
        $region45: #{tpu_custom_call.1} parent=43 // pred_check
          %p316 = pneg %p61
        $region46: #{tpu_custom_call.1} parent=43 // pred_check_branch
          %318 = sbr.rel (%p316) target = $region48
        $region47: #{tpu_custom_call.1} parent=43 // pred_region
          %p319 = scmp.lt.s32.totalorder %s20, 1
          %s320 = scalar_select %p319, %s20, 1
          %s321 = smul.addr %s320, 8
          %s322 = scalar_lea.vmem %s1, %s321
        $region48: #{tpu_custom_call.1} parent=43 // pred_fallthru
          _
        // Predicated region
        $region49: #{tpu_custom_call.1} parent=43 // pred_check
          %p323 = pneg %p87
        $region50: #{tpu_custom_call.1} parent=43 // pred_check_branch
          %325 = sbr.rel (%p323) target = $region52
        $region51: #{tpu_custom_call.1} parent=43 // pred_region
          %p326 = scmp.lt.s32.totalorder %s20, 1
          %s327 = scalar_select %p326, %s20, 1
          %s328 = smul.addr %s327, 8
          %s329 = scalar_lea.vmem %s2, %s328
        $region52: #{tpu_custom_call.1} parent=43 // pred_fallthru
          _
      $region44: #{tpu_custom_call.1} parent=5 // pred_fallthru
        _
      %p330 = scmp.le.s32.totalorder 1, %s20
      %p331 = scmp.lt.s32.totalorder %s20, 3
      %p332 = pnand %p330, %p331
      %p333 = pneg %p332
      // Predicated region
      $region53: #{tpu_custom_call.1} parent=5 // pred_check
        _
      $region54: #{tpu_custom_call.1} parent=5 // pred_check_branch
        %335 = sbr.rel (%p332) target = $region56
      $region55: #{tpu_custom_call.1} parent=5 // pred_region
        %s336 = ssub.s32 %s20, 1
        // Predicated region
        $region57: #{tpu_custom_call.1} parent=55 // pred_check
          %p337 = pneg %p114
        $region58: #{tpu_custom_call.1} parent=55 // pred_check_branch
          %339 = sbr.rel (%p337) target = $region60
        $region59: #{tpu_custom_call.1} parent=55 // pred_region
          %341 = dma.done [#allocation4], 256
        $region60: #{tpu_custom_call.1} parent=55 // pred_fallthru
          _
        // Predicated region
        $region61: #{tpu_custom_call.1} parent=55 // pred_check
          %p342 = pneg %p135
        $region62: #{tpu_custom_call.1} parent=55 // pred_check_branch
          %344 = sbr.rel (%p342) target = $region64
        $region63: #{tpu_custom_call.1} parent=55 // pred_region
          %346 = dma.done [#allocation7], 16
        $region64: #{tpu_custom_call.1} parent=55 // pred_fallthru
          _
        // Predicated region
        $region65: #{tpu_custom_call.1} parent=55 // pred_check
          %p347 = pneg %p198
        $region66: #{tpu_custom_call.1} parent=55 // pred_check_branch
          %349 = sbr.rel (%p347) target = $region68
        $region67: #{tpu_custom_call.1} parent=55 // pred_region
          %351 = dma.done [#allocation7], 512
        $region68: #{tpu_custom_call.1} parent=55 // pred_fallthru
          _
        %p352 = pneg %p41
        %p353 = pneg %p38
        %p354 = scmp.lt.s32.totalorder %s25, 1
        %s355 = scalar_select %p354, %s25, 1
        %s356 = smul.addr %s355, 8
        %s357 = scalar_lea.vmem %s1, %s356
        %p358 = pneg %p67
        %p359 = pneg %p64
        %p360 = scmp.lt.s32.totalorder %s25, 1
        %s361 = scalar_select %p360, %s25, 1
        %s362 = smul.addr %s361, 8
        %s363 = scalar_lea.vmem %s2, %s362
        %p364 = pneg %p93
        %p365 = pneg %p90
        %p366 = pneg %p114
        %p367 = pneg %p111
        %p368 = pneg %p135
        %p369 = pneg %p132
        %p370 = pneg %p156
        %p371 = pneg %p153
        %p372 = pneg %p177
        %p373 = pneg %p174
        %p374 = pneg %p198
        %p375 = pneg %p195
        %p376 = pneg %p219
        %p377 = pneg %p216
        %p378 = pneg %p245
        %p379 = pneg %p242
        %s380 = sand.u32 %s232, 1
        %s381 = scalar_lea.sflag [#allocation5], %s380
        %s382 = sand.u32 %s232, 1
        %s383 = smul.addr %s382, 8
        %s384 = scalar_lea.vmem [#allocation9], %s383
        %p385 = scmp.lt.s32.totalorder %s25, 1
        %s386 = scalar_select %p385, %s25, 1
        %s387 = smul.addr %s386, 8
        %s388 = scalar_lea.vmem %s1, %s387
        %p389 = scmp.lt.s32.totalorder %s25, 1
        %s390 = scalar_select %p389, %s25, 1
        %s391 = smul.addr %s390, 8
        %s392 = scalar_lea.vmem %s2, %s391
        %v393 = vld [vmem:[%s388] sm:$0xff]
        %v394 = vld [vmem:[#allocation3] sm:$0xff]
        %v395 = vld [vmem:[#allocation3 + $0x8] sm:$0xff]
        %v396 = vld [vmem:[#allocation6] sm:$0x1]
        %v398 = vperm.slane %v396, 0
        %vm400 = vcmask 130048
        %v402 = vsel %vm400, %v393, 0
        %404 = vmatpush.msra.mxu0 0.0
        %405 = vmatpush.msra.mxu0 0.0
        %406 = vmatpush.msra.mxu0 0.0
        %407 = vmatpush.msra.mxu0 0.0
        %408 = vmatpush.msra.mxu0 0.0
        %409 = vmatpush.msra.mxu0 0.0
        %410 = vmatpush.msra.mxu0 0.0
        %411 = vmatpush.msra.mxu0 0.0
        %412 = vmatpush.msra.mxu0 0.0
        %413 = vmatpush.msra.mxu0 0.0
        %414 = vmatpush.msra.mxu0 0.0
        %415 = vmatpush.msra.mxu0 0.0
        %416 = vmatpush.msra.mxu0 0.0
        %417 = vmatpush.msra.mxu0 0.0
        %418 = vmatpush.msra.mxu0 %v395
        %419 = vmatpush.msra.mxu0 %v394
        %420 = vmatmul.f32.gmra.mxu0 %v402
        %v421 = vpop.f32.mrf.mxu0
        %v422 = vadd.f32 %v398, %v421
        %423 = vdwg.mxu0
        %v424 = vld [vmem:[%s0] sm:$0xff]
        %v426 = vsel %vm400, %v424, 0
        %v429 = vsel %vm400, %v422, 0
        %431 = vmatpush.xpose.msra.mxu0 0.0
        %432 = vmatpush.xpose.msra.mxu0 0.0
        %433 = vmatpush.xpose.msra.mxu0 0.0
        %434 = vmatpush.xpose.msra.mxu0 0.0
        %435 = vmatpush.xpose.msra.mxu0 0.0
        %436 = vmatpush.xpose.msra.mxu0 0.0
        %437 = vmatpush.xpose.msra.mxu0 0.0
        %438 = vmatpush.xpose.msra.mxu0 0.0
        %439 = vmatpush.xpose.msra.mxu0 0.0
        %440 = vmatpush.xpose.msra.mxu0 0.0
        %441 = vmatpush.xpose.msra.mxu0 0.0
        %442 = vmatpush.xpose.msra.mxu0 0.0
        %443 = vmatpush.xpose.msra.mxu0 0.0
        %444 = vmatpush.xpose.msra.mxu0 0.0
        %445 = vmatpush.xpose.msra.mxu0 0.0
        %446 = vmatpush.xpose.msra.mxu0 %v429
        %447 = vmatmul.f32.gmra.mxu0 %v426
        %v448 = vpop.f32.mrf.mxu0
        %v449 = vadd.f32 0.0, %v448
        %450 = vdwg.mxu0
        %v451 = vld [vmem:[%s392] sm:$0xff]
        %vm452 = vcmask 64512
        %v453 = vsel %vm452, %v449, -inf
        %454 = vmax.xlane.f32.xlu0 %v453
        %v455 = vpop.xlane.xlu0 %454
        %v456 = vsub.f32 %v449, %v455
        %v457 = vmul.f32 %v456, 1.442695
        %v458 = vpow.pop %v457
        %v460 = vsel %vm452, %v458, 0
        %462 = vmatpush.msra.mxu0 0.0
        %463 = vmatpush.msra.mxu0 0.0
        %464 = vmatpush.msra.mxu0 0.0
        %465 = vmatpush.msra.mxu0 0.0
        %466 = vmatpush.msra.mxu0 0.0
        %467 = vmatpush.msra.mxu0 0.0
        %468 = vmatpush.msra.mxu0 0.0
        %469 = vmatpush.msra.mxu0 0.0
        %470 = vmatpush.msra.mxu0 0.0
        %471 = vmatpush.msra.mxu0 0.0
        %472 = vmatpush.msra.mxu0 0.0
        %473 = vmatpush.msra.mxu0 0.0
        %474 = vmatpush.msra.mxu0 0.0
        %475 = vmatpush.msra.mxu0 0.0
        %476 = vmatpush.msra.mxu0 0.0
        %477 = vmatpush.msra.mxu0 %v451
        %478 = vmatmul.f32.gmra.mxu0 %v460
        %v479 = vpop.f32.mrf.mxu0
        %v480 = vadd.f32 0.0, %v479
        %481 = vdwg.mxu0
        %vm482 = vcmp.gt.f32.partialorder %v480, 0.0
        %v483 = vsel %vm482, %v480, 1.0
        %485 = vrot.lane.b32.xlu0 %v483, 124
        %v486 = vpop.permute.xlu0 %485
        %v488 = vrcp.pop %v486
        %v489 = vmul.f32 %v486, %v488
        %v490 = vsub.f32 1.0, %v489
        %v491 = vmul.f32 %v488, %v490
        %v492 = vadd.f32 %v488, %v491
        %vm493 = vweird.f32 %v486
        %vm494 = vweird.f32 %v488
        %vm495 = vmor %vm493, %vm494
        %v496 = vsel %vm495, %v488, %v492
        %v497 = vand.u32 2147483647, %v486
        %vm498 = vcmp.eq.f32.partialorder %v497, 8.507059e+37
        %v499 = vand.u32 %v486, 2147483648
        %v500 = vor.u32 1.1754944e-38, %v499
        %v501 = vsel %vm498, %v500, %v496
        %v502 = vmul.f32 %v480, %v501
        %vm503 = vcmask 31744
        %504 = vst.msk [vmem:[#allocation2] sm:$0xff] %vm503, %v502
        %v505 = vld [vmem:[#allocation2] sm:$0xff]
        %v506 = vld [vmem:[%s5] sm:$0xf]
        %v507 = vld [vmem:[%s6] sm:$0x1]
        %v509 = vperm.slane %v507, 0
        %v512 = vsel %vm503, %v505, 0
        %vm514 = vcmask 1043456
        %v516 = vsel %vm514, %v506, 0
        %518 = vmatpush.msra.mxu0 0.0
        %519 = vmatpush.msra.mxu0 0.0
        %520 = vmatpush.msra.mxu0 0.0
        %521 = vmatpush.msra.mxu0 0.0
        %522 = vmatpush.msra.mxu0 0.0
        %523 = vmatpush.msra.mxu0 0.0
        %524 = vmatpush.msra.mxu0 0.0
        %525 = vmatpush.msra.mxu0 0.0
        %526 = vmatpush.msra.mxu0 0.0
        %527 = vmatpush.msra.mxu0 0.0
        %528 = vmatpush.msra.mxu0 0.0
        %529 = vmatpush.msra.mxu0 0.0
        %530 = vmatpush.msra.mxu0 0.0
        %531 = vmatpush.msra.mxu0 0.0
        %532 = vmatpush.msra.mxu0 0.0
        %533 = vmatpush.msra.mxu0 %v516
        %534 = vmatmul.f32.gmra.mxu0 %v512
        %v535 = vpop.f32.mrf.mxu0
        %v536 = vadd.f32 %v509, %v535
        %537 = vdwg.mxu0
        %v538 = vld [vmem:[#allocation8] sm:$0xff]
        %v539 = vld [vmem:[#allocation8 + $0x8] sm:$0xff]
        %v540 = vld [vmem:[#allocation8 + $0x10] sm:$0xff]
        %v541 = vld [vmem:[#allocation8 + $0x18] sm:$0xff]
        %v542 = vld [vmem:[%s8] sm:$0x1]
        %v544 = vperm.slane %v542, 0
        %vm546 = vcmask 261120
        %v548 = vsel %vm546, %v536, 0
        %550 = vmatpush.msra.mxu0 0.0
        %551 = vmatpush.msra.mxu0 0.0
        %552 = vmatpush.msra.mxu0 0.0
        %553 = vmatpush.msra.mxu0 0.0
        %554 = vmatpush.msra.mxu0 0.0
        %555 = vmatpush.msra.mxu0 0.0
        %556 = vmatpush.msra.mxu0 0.0
        %557 = vmatpush.msra.mxu0 0.0
        %558 = vmatpush.msra.mxu0 0.0
        %559 = vmatpush.msra.mxu0 0.0
        %560 = vmatpush.msra.mxu0 0.0
        %561 = vmatpush.msra.mxu0 0.0
        %562 = vmatpush.msra.mxu0 %v541
        %563 = vmatpush.msra.mxu0 %v540
        %564 = vmatpush.msra.mxu0 %v539
        %565 = vmatpush.msra.mxu0 %v538
        %566 = vmatmul.f32.gmra.mxu0 %v548
        %v567 = vpop.f32.mrf.mxu0
        %v568 = vadd.f32 %v544, %v567
        %569 = vdwg.mxu0
        %570 = vst [vmem:[%s384] sm:$0xff] %v568
        %s571 = sand.u32 %s232, 1
        %s572 = scalar_lea.sflag [#allocation5], %s571
        %s573 = sand.u32 %s232, 1
        %s574 = smul.addr %s573, 8
        %s575 = scalar_lea.vmem [#allocation9], %s574
        // Predicated region
        $region69: #{tpu_custom_call.1} parent=55 // pred_check
          %p576 = pneg %p242
        $region70: #{tpu_custom_call.1} parent=55 // pred_check_branch
          %578 = sbr.rel (%p576) target = $region72
        $region71: #{tpu_custom_call.1} parent=55 // pred_region
          %580 = vsyncadd %s572, 0
          %s581 = smul.addr %s25, 8
          %s582 = scalar_lea.hbm %s9, %s581
          %s584 = sshll.u32 %s575, 4
          %s585 = int_to_ptr.vmem [resolvable:$true] %s584
          %s586 = sshll.u32 %s582, 4
          %s587 = int_to_ptr.hbm [resolvable:$true] %s586
          %589 = dma.vmem_to_hbm [thread:$0]  %s585, 128, %s587, %s572
        $region72: #{tpu_custom_call.1} parent=55 // pred_fallthru
          _
      $region56: #{tpu_custom_call.1} parent=5 // pred_fallthru
        _
      %p590 = scmp.le.s32.totalorder 2, %s20
      // Predicated region
      $region73: #{tpu_custom_call.1} parent=5 // pred_check
        %p591 = pneg %p590
      $region74: #{tpu_custom_call.1} parent=5 // pred_check_branch
        %593 = sbr.rel (%p591) target = $region76
      $region75: #{tpu_custom_call.1} parent=5 // pred_region
        %s594 = ssub.s32 %s20, 2
        // Predicated region
        $region77: #{tpu_custom_call.1} parent=75 // pred_check
          %p595 = pneg %p248
        $region78: #{tpu_custom_call.1} parent=75 // pred_check_branch
          %597 = sbr.rel (%p595) target = $region80
        $region79: #{tpu_custom_call.1} parent=75 // pred_region
          %s598 = sand.u32 %s233, 1
          %s599 = scalar_lea.sflag [#allocation5], %s598
          %s600 = sand.u32 %s233, 1
          %s601 = smul.addr %s600, 8
          %s602 = scalar_lea.vmem [#allocation9], %s601
          %604 = dma.done %s599, 128
        $region80: #{tpu_custom_call.1} parent=75 // pred_fallthru
          _
      $region76: #{tpu_custom_call.1} parent=5 // pred_fallthru
        _
    $region6: #{tpu_custom_call.1} parent=1 // loop_footer
      %s24 = sadd.s32 1, %s20
    $region7: #{tpu_custom_call.1} parent=1 // loop_footer_branch
      %19 = sbr.rel target = $region3
    $region8: #{tpu_custom_call.1} parent=1 // loop_exit
      _
    %605 = vsyncpa [#allocation4], 1
    %s606 = scalar_lea.sflag [#allocation4], 1
    %607 = vsyncpa %s606, 1
    %608 = vsyncpa [#allocation7], 1
    %609 = vsyncpa [#allocation5], 1
    %s610 = scalar_lea.sflag [#allocation5], 1
    %611 = vsyncpa %s610, 1

</llo_original>
